<compile_context>
chip_gen: v6e
topology: v6e:2x2x1
jax: 0.10.0
libtpu: 0.0.40
codegen_flags: <defaults>
</compile_context>

<pallas_src>
import math

import jax
import jax.numpy as jnp
from jax.experimental import pallas as pl
from jax.experimental.pallas import tpu as pltpu

_LANE_CANDIDATES = (4096, 2048, 1024, 512, 256, 128)
_TARGET_TILE_BYTES = 2 * 1024 * 1024  # per-buffer tile size; 4x resident w/ double buffering


def _scale_kernel(scale_ref, x_ref, o_ref):
    # scale_ref: (1, 1) float32 scalar in SMEM; x_ref/o_ref: (TM, L) tile in VMEM.
    s = scale_ref[0, 0]
    o_ref[...] = (x_ref[...].astype(jnp.float32) * s).astype(o_ref.dtype)


def constant_scale(x: jax.Array, scale: jax.Array) -> jax.Array:
    """Computes x * scale where `scale` is a single learnable scalar (shape (1,))."""
    orig_shape = x.shape
    orig_dtype = x.dtype
    total = int(math.prod(orig_shape))

    # --- choose a lane-dense 2D layout: (rows, L), L a multiple of 128 ---
    L = next((c for c in _LANE_CANDIDATES if total % c == 0), None)
    pad = 0
    if L is None:
        L = 1024 if total >= 1024 else 128
        pad = (-total) % L

    x_flat = x.reshape(-1)
    if pad:
        x_flat = jnp.pad(x_flat, (0, pad))
    rows = (total + pad) // L
    x2 = x_flat.reshape(rows, L)

    # --- choose a row-tile size: ~2 MiB per tile, multiple of 8 rows ---
    itemsize = jnp.dtype(orig_dtype).itemsize
    max_tm = max(8, (_TARGET_TILE_BYTES // (L * itemsize)) // 8 * 8)
    if rows <= max_tm:
        tm = rows  # full extent: allowed even if not a multiple of 8
    else:
        tm = max_tm
        for t in range(max_tm, 7, -8):  # prefer a divisor -> no ragged tail, unmasked stores
            if rows % t == 0:
                tm = t
                break
    grid = (pl.cdiv(rows, tm),)

    scale2 = jnp.asarray(scale, dtype=jnp.float32).reshape(1, 1)

    out2 = pl.pallas_call(
        _scale_kernel,
        out_shape=jax.ShapeDtypeStruct((rows, L), orig_dtype),
        grid=grid,
        in_specs=[
            pl.BlockSpec(memory_space=pltpu.SMEM),      # scalar scale (float32)
            pl.BlockSpec((tm, L), lambda i: (i, 0)),    # streamed row tiles
        ],
        out_specs=pl.BlockSpec((tm, L), lambda i: (i, 0)),
        compiler_params=pltpu.CompilerParams(
            dimension_semantics=("parallel",),
        ),
    )(scale2, x2)

    out_flat = out2.reshape(-1)
    if pad:
        out_flat = out_flat[:total]
    return out_flat.reshape(orig_shape)


if __name__ == "__main__":
    key = jax.random.PRNGKey(0)

    # NCHW input, same convention as the PyTorch module.
    x = jax.random.normal(key, (2, 4, 16, 16), dtype=jnp.float32)

    # Deterministic parameter init: nn.Parameter(torch.ones(1)) -> ones of shape (1,)
    scale = jnp.ones((1,), dtype=jnp.float32)

    out = constant_scale(x, scale)
    out = jax.block_until_ready(out)

    ref = x * scale[0]
    assert out.shape == x.shape and out.dtype == x.dtype
    assert jnp.allclose(out, ref, atol=1e-6, rtol=1e-6)

    # Also exercise the non-128-divisible fallback path (pad + slice).
    key2 = jax.random.PRNGKey(1)
    x_odd = jax.random.normal(key2, (2, 3, 7, 5), dtype=jnp.float32)
    scale2 = jnp.full((1,), 1.5, dtype=jnp.float32)
    out_odd = jax.block_until_ready(constant_scale(x_odd, scale2))
    assert out_odd.shape == x_odd.shape
    assert jnp.allclose(out_odd, x_odd * scale2[0], atol=1e-6, rtol=1e-6)

    print("KERNEL_OK")
</pallas_src>

<mosaic_0001>
module attributes {stable_mosaic.version = 11 : i64} {
  func.func @_scale_kernel(%arg0: i32, %arg1: memref<1x1xf32, #tpu.memory_space<smem>>, %arg2: memref<1x2048xf32, #tpu.memory_space<vmem>>, %arg3: memref<1x2048xf32, #tpu.memory_space<vmem>>) attributes {dimension_semantics = [#tpu.dimension_semantics<parallel>], iteration_bounds = array<i64: 1>, scalar_prefetch = 0 : i64, scratch_operands = 0 : i64, tpu.core_type = #tpu.core_type<tc>, window_params = [{transform_indices = @transform_0, window_bounds = array<i64: 1, 1>}, {transform_indices = @transform_1, window_bounds = array<i64: 1, 2048>}, {transform_indices = @transform_2, window_bounds = array<i64: 1, 2048>}]} {
    %c0 = arith.constant 0 : index
    %c0_0 = arith.constant 0 : index
    %0 = memref.load %arg1[%c0, %c0_0] : memref<1x1xf32, #tpu.memory_space<smem>>
    %c0_1 = arith.constant 0 : index
    %c0_2 = arith.constant 0 : index
    %1 = vector.load %arg2[%c0_1, %c0_2] : memref<1x2048xf32, #tpu.memory_space<vmem>>, vector<1x2048xf32>
    %2 = vector.broadcast %0 : f32 to vector<1x2048xf32>
    %3 = arith.mulf %1, %2 : vector<1x2048xf32>
    %c0_3 = arith.constant 0 : index
    %c0_4 = arith.constant 0 : index
    %4 = vector.load %arg3[%c0_3, %c0_4] : memref<1x2048xf32, #tpu.memory_space<vmem>>, vector<1x2048xf32>
    tpu.vector_store %arg3[%c0_3, %c0_4], %3 {strides = array<i32>} : memref<1x2048xf32, #tpu.memory_space<vmem>>, vector<1x2048xf32>,
    return
  }
  func.func @transform_0(%arg0: i32) -> (i32, i32) {
    %c0_i32 = arith.constant 0 : i32
    %c0_i32_0 = arith.constant 0 : i32
    %c0_i32_1 = arith.constant 0 : i32
    return %c0_i32, %c0_i32_0 : i32, i32
  }
  func.func @transform_1(%arg0: i32) -> (i32, i32) {
    %c0_i32 = arith.constant 0 : i32
    %c0_i32_0 = arith.constant 0 : i32
    return %arg0, %c0_i32 : i32, i32
  }
  func.func @transform_2(%arg0: i32) -> (i32, i32) {
    %c0_i32 = arith.constant 0 : i32
    %c0_i32_0 = arith.constant 0 : i32
    return %arg0, %c0_i32 : i32, i32
  }
}

</mosaic_0001>

<llo_original>
// kernel: tpu_custom_call.1
$region0: #{tpu_custom_call.1}
  #allocation0 [shape = 'u32[]', space=smem, size = 0x4, offset = 0x4, fixed_abs, tag = 'smem constant byte address 0x4 - core index']
  #allocation1 [shape = 'u32[144,128]{1,0:T(1,128)}', space=vmem, size = 0x12000, scoped, tag = 'internal scratch']
  #allocation2 [shape = 'f32[1,1]{1,0:T(1,128)S(6)}', space=smem, size = 0x200, scoped, tag = 'scoped memory for tpu_custom_call.1']
  %s0 = inlined_call_operand.<no memory space> [shape: f32[1,1], index: 0, kind: input, shape index: {}]
  %s1 = inlined_call_operand.hbm [shape: f32[1,2048], index: 1, kind: input, shape index: {}]
  %s2 = inlined_call_operand.hbm [shape: f32[1,2048], index: 2, kind: output, shape index: {}]
  %s3 = sld [smem:[#allocation0]]
  $region22: #{tpu_custom_call.1} parent=0
    _
  %s5 = ssub.s32 1, %s3
  %s6 = scalar_select 0, %s5, %s3
  %7 = sst [smem:[#allocation2]] %s0
  $region1: #{tpu_custom_call.1} parent=0
    #allocation3 [shape = 'u8[8192]{0}', space=vmem, size = 0x2000, scoped, tag = 'input window, operand 1, single buffered']
    #allocation4 [shape = 's32[1]{0}', space=sflag, size = 0x4, scoped, tag = 'scoped memory for tpu_custom_call.1']
    #allocation5 [shape = 's32[1]{0}', space=sflag, size = 0x4, scoped, tag = 'scoped memory for tpu_custom_call.1']
    #allocation6 [shape = 'u8[8192]{0}', space=vmem, size = 0x2000, scoped, tag = 'output window, operand 0, single buffered']
    %8 = vsyncpa [#allocation4], 0
    %9 = vsyncpa [#allocation5], 0
    // Predicated region
    $region2: #{tpu_custom_call.1} parent=1 // pred_check
      _
    $region3: #{tpu_custom_call.1} parent=1 // pred_check_branch
      %11 = sbr.rel (0) target = $region5
    $region4: #{tpu_custom_call.1} parent=1 // pred_region
      _
    $region5: #{tpu_custom_call.1} parent=1 // pred_fallthru
      _
    // Predicated region
    $region6: #{tpu_custom_call.1} parent=1 // pred_check
      _
    $region7: #{tpu_custom_call.1} parent=1 // pred_check_branch
      %13 = sbr.rel (0) target = $region9
    $region8: #{tpu_custom_call.1} parent=1 // pred_region
      %s15 = ssub.s32 256, 256
      %16 = vsyncadd [#allocation4], %s15
      %s18 = sshll.u32 [#allocation3], 4
      %s19 = int_to_ptr.vmem [resolvable:$true] %s18
      %21 = dma.hbm_to_vmem [thread:$0]  %s1, 256, %s19, [#allocation4]
    $region9: #{tpu_custom_call.1} parent=1 // pred_fallthru
      _
    // Predicated region
    $region10: #{tpu_custom_call.1} parent=1 // pred_check
      _
    $region11: #{tpu_custom_call.1} parent=1 // pred_check_branch
      %23 = sbr.rel (0) target = $region13
    $region12: #{tpu_custom_call.1} parent=1 // pred_region
      %24 = dma.done [#allocation4], 256
    $region13: #{tpu_custom_call.1} parent=1 // pred_fallthru
      _
    %s25 = sld [smem:[#allocation2]]
    %v26 = vld [vmem:[#allocation3] sm:$0xff]
    %v27 = vld [vmem:[#allocation3 + $0x8] sm:$0xff]
    %v28 = vstv %s25
    %v29 = vmul.f32 %v26, %v28
    %v30 = vmul.f32 %v27, %v28
    %31 = vst [vmem:[#allocation6] sm:$0xff] %v29
    %32 = vst [vmem:[#allocation6 + $0x8] sm:$0xff] %v30
    // Predicated region
    $region14: #{tpu_custom_call.1} parent=1 // pred_check
      _
    $region15: #{tpu_custom_call.1} parent=1 // pred_check_branch
      %34 = sbr.rel (0) target = $region17
    $region16: #{tpu_custom_call.1} parent=1 // pred_region
      %s36 = ssub.s32 256, 256
      %37 = vsyncadd [#allocation5], %s36
      %s39 = sshll.u32 [#allocation6], 4
      %s40 = int_to_ptr.vmem [resolvable:$true] %s39
      %42 = dma.vmem_to_hbm [thread:$0]  %s40, 256, %s2, [#allocation5]
    $region17: #{tpu_custom_call.1} parent=1 // pred_fallthru
      _
    // Predicated region
    $region18: #{tpu_custom_call.1} parent=1 // pred_check
      _
    $region19: #{tpu_custom_call.1} parent=1 // pred_check_branch
      %44 = sbr.rel (0) target = $region21
    $region20: #{tpu_custom_call.1} parent=1 // pred_region
      %45 = dma.done [#allocation5], 256
    $region21: #{tpu_custom_call.1} parent=1 // pred_fallthru
      _
    %46 = vsyncpa [#allocation4], 1
    %47 = vsyncpa [#allocation5], 1

</llo_original>
